<compile_context>
chip_gen: v7x
topology: tpu7x:2x2x1
jax: 0.10.0
libtpu: 0.0.40
codegen_flags: <defaults>
</compile_context>

<pallas_src>
import numpy as np
import jax
import jax.numpy as jnp
from jax.experimental import pallas as pl
from jax.experimental.pallas import tpu as pltpu


# --------------------------------------------------------------------------- #
# Constant structure matrix S (same as the PyTorch helper).
# --------------------------------------------------------------------------- #
def get_matrixS(n):
    mat_nxn = np.zeros([n, n], dtype=int)
    for row_num in range(1, n + 1):
        i = row_num - 1
        if row_num == 1:
            mat_nxn[i][i + 1] = 1
            mat_nxn[i][i + 2] = 1
        elif row_num == 2:
            mat_nxn[i][i - 1] = 1
            mat_nxn[i][i + 2] = 1
        elif row_num == n - 1:
            mat_nxn[i][i + 1] = 1
            mat_nxn[i][i - 2] = 1
        elif row_num == n:
            mat_nxn[i][i - 1] = 1
            mat_nxn[i][i - 2] = 1
        elif row_num % 2 == 1:
            mat_nxn[i][i + 1] = 1
            mat_nxn[i][i + 2] = 1
            mat_nxn[i][i - 2] = 1
        elif row_num % 2 == 0:
            mat_nxn[i][i - 1] = 1
            mat_nxn[i][i + 2] = 1
            mat_nxn[i][i - 2] = 1
    mat_nxn = mat_nxn + np.eye(n, dtype=int)
    mat_2nx2n = np.repeat(np.repeat(mat_nxn, 2, 0), 2, 1)
    return mat_2nx2n.astype(np.float32)


# --------------------------------------------------------------------------- #
# Kernel: grid = (batch tiles, K tiles of D).  K (reduction) is the last axis.
# --------------------------------------------------------------------------- #
def sle_kernel(x_ref, w1_ref, b1_ref, w2s_ref, b2s_ref, y1_ref, y2_ref, acc_ref):
    k = pl.program_id(1)

    @pl.when(k == 0)
    def _():
        acc_ref[...] = jnp.zeros_like(acc_ref)

    # fc1 partial product for this K tile.  x is streamed in its native dtype;
    # the bf16 cast for the MXU happens here, per tile (no extra HBM pass).
    xv = x_ref[...]
    if xv.dtype != jnp.bfloat16:
        xv = xv.astype(jnp.bfloat16)
    acc_ref[...] += jnp.dot(xv, w1_ref[...], preferred_element_type=jnp.float32)

    # Epilogue once per batch tile: tanh, fc2 (with S folded in), sigmoid.
    @pl.when(k == pl.num_programs(1) - 1)
    def _():
        h = jnp.tanh(acc_ref[...] + b1_ref[...])
        y1_ref[...] = h.astype(y1_ref.dtype)
        z = jnp.dot(h, w2s_ref[...], preferred_element_type=jnp.float32) + b2s_ref[...]
        y2_ref[...] = jax.nn.sigmoid(z).astype(y2_ref.dtype)


# --------------------------------------------------------------------------- #
# Tile planning (explicit VMEM budget, valid on v5e / v6e / v7x).
# --------------------------------------------------------------------------- #
_K_TILE_CANDIDATES = (16384, 8192, 4096, 2048, 1024, 512, 256, 128)
_STREAM_VMEM_BUDGET = 22 * 1024 * 1024   # double-buffered x + w1 blocks
_VMEM_LIMIT_BYTES = 32 * 1024 * 1024     # explicit scoped-VMEM limit


def _round_up(a, m):
    return ((a + m - 1) // m) * m


def _plan_batch_tile(B):
    """Pick (tb, B_pad).  For B > 8 guarantee >= 2 batch tiles (v7x megacore)."""
    if B <= 8:
        return B, B                        # full-dim block; no padding needed
    half = _round_up((B + 1) // 2, 8)      # split across >= 2 tiles, 8-row granule
    tb = min(512, half)
    return tb, _round_up(B, tb)


def _plan_k_tile(D_pad0, tb, x_itemsize, nDense1):
    """Largest K tile whose double-buffered x + (lane-padded) w1 blocks fit the budget."""
    lane_n1 = max(_round_up(nDense1, 128), 128)
    tk = 128
    for cand in _K_TILE_CANDIDATES:
        foot = 2 * (tb * cand * x_itemsize + cand * lane_n1 * 2)  # 2 bufs each
        if foot <= _STREAM_VMEM_BUDGET:
            tk = cand
            break
    if tk >= D_pad0:
        return D_pad0, D_pad0              # single K step, full-dim block
    return tk, _round_up(D_pad0, tk)


# --------------------------------------------------------------------------- #
# One-time weight prep (do this ONCE, outside the per-step forward).
# --------------------------------------------------------------------------- #
def prepare_sle_params(w1, b1, w2, b2):
    """w1:(D,nDense1) w2:(nDense1,nDense2) stored as (in,out) == PyTorch W.T."""
    D, nDense1 = w1.shape
    nDense2 = w2.shape[1]
    S = jnp.asarray(get_matrixS(nDense2 // 2))                    # (nDense2, nDense2)
    w2s = (w2.astype(jnp.float32) @ S).astype(jnp.float32)        # fold S into fc2
    b2s = (b2.astype(jnp.float32).reshape(1, nDense2) @ S).reshape(1, nDense2)
    b1f = b1.astype(jnp.float32).reshape(1, nDense1)

    D_pad = _round_up(D, 128)
    w1_bf = w1.astype(jnp.bfloat16)                                # cast once
    if D_pad != D:
        w1_bf = jnp.pad(w1_bf, ((0, D_pad - D), (0, 0)))           # zero rows: exact
    return dict(w1=w1_bf, b1=b1f, w2s=w2s, b2s=b2s,
                D=D, D_pad=D_pad, nDense1=nDense1, nDense2=nDense2)


# --------------------------------------------------------------------------- #
# Forward.
# --------------------------------------------------------------------------- #
def sle_forward(x_nchw, params, *, tk=None):
    B = x_nchw.shape[0]
    D = params["D"]
    nDense1, nDense2 = params["nDense1"], params["nDense2"]
    assert int(np.prod(x_nchw.shape[1:])) == D

    # nn.Flatten() on NCHW == row-major reshape (no data movement).
    x = x_nchw.reshape(B, D)
    x_itemsize = x.dtype.itemsize

    tb, B_pad = _plan_batch_tile(B)
    if tk is None:
        tk, D_pad = _plan_k_tile(params["D_pad"], tb, x_itemsize, nDense1)
    else:
        assert tk % 128 == 0 or tk == params["D_pad"]
        D_pad = _round_up(params["D_pad"], tk)

    w1 = params["w1"]
    if D_pad != w1.shape[0]:                                       # tiny, zero-exact
        w1 = jnp.pad(w1, ((0, D_pad - w1.shape[0]), (0, 0)))
    if (B_pad, D_pad) != (B, D):                                   # only when unaligned
        x = jnp.pad(x, ((0, B_pad - B), (0, D_pad - D)))

    grid = (B_pad // tb, D_pad // tk)
    n_batch_tiles = grid[0]

    cost = pl.CostEstimate(
        flops=2 * B_pad * D_pad * nDense1 + 2 * B_pad * nDense1 * nDense2,
        transcendentals=B_pad * (nDense1 + nDense2),
        bytes_accessed=(B_pad * D_pad * x_itemsize               # x stream
                        + n_batch_tiles * D_pad * nDense1 * 2    # w1 re-stream / batch tile
                        + B_pad * (nDense1 + nDense2) * 4),      # outputs
    )

    y1, y2 = pl.pallas_call(
        sle_kernel,
        out_shape=(
            jax.ShapeDtypeStruct((B_pad, nDense1), jnp.float32),
            jax.ShapeDtypeStruct((B_pad, nDense2), jnp.float32),
        ),
        grid_spec=pltpu.PrefetchScalarGridSpec(
            num_scalar_prefetch=0,
            grid=grid,
            in_specs=[
                pl.BlockSpec((tb, tk), lambda i, k: (i, k)),            # x (native dtype)
                pl.BlockSpec((tk, nDense1), lambda i, k: (k, 0)),       # w1 (bf16)
                pl.BlockSpec((1, nDense1), lambda i, k: (0, 0)),        # b1 (f32)
                pl.BlockSpec((nDense1, nDense2), lambda i, k: (0, 0)),  # W2@S (f32)
                pl.BlockSpec((1, nDense2), lambda i, k: (0, 0)),        # b2@S (f32)
            ],
            out_specs=(
                pl.BlockSpec((tb, nDense1), lambda i, k: (i, 0)),       # y1
                pl.BlockSpec((tb, nDense2), lambda i, k: (i, 0)),       # y2
            ),
            scratch_shapes=[pltpu.VMEM((tb, nDense1), jnp.float32)],    # fc1 accumulator
        ),
        compiler_params=pltpu.CompilerParams(
            dimension_semantics=("parallel", "arbitrary"),
            vmem_limit_bytes=_VMEM_LIMIT_BYTES,
        ),
        cost_estimate=cost,
    )(x, w1, params["b1"], params["w2s"], params["b2s"])

    if B_pad != B:
        y1, y2 = y1[:B], y2[:B]
    return y1, y2


# --------------------------------------------------------------------------- #
# Self-test.
# --------------------------------------------------------------------------- #
if __name__ == "__main__":
    # Small shapes consistent with the module: input_dim = [C,H,W] = [4,16,16],
    # nDense1 = 32 (arbitrary hidden), nDense2 = 8 (= 2 * 4 landmarks).
    B, C, H, W = 2, 4, 16, 16
    nDense1, nDense2 = 32, 8
    D = C * H * W

    key = jax.random.PRNGKey(0)
    kx, kw1, kb1, kw2, kb2 = jax.random.split(key, 5)

    x = jax.random.normal(kx, (B, C, H, W), dtype=jnp.float32)

    # Deterministic synthetic parameters (not a checkpoint load).
    w1 = jax.random.normal(kw1, (D, nDense1), dtype=jnp.float32) * (1.0 / np.sqrt(D))
    b1 = jax.random.normal(kb1, (1, nDense1), dtype=jnp.float32) * 0.01
    w2 = jax.random.normal(kw2, (nDense1, nDense2), dtype=jnp.float32) * (
        1.0 / np.sqrt(nDense1)
    )
    b2 = jax.random.normal(kb2, (1, nDense2), dtype=jnp.float32) * 0.01

    params = prepare_sle_params(w1, b1, w2, b2)   # one-time prep (bf16 cast, S fold)

    # tk=256 -> 4 K steps: exercises the accumulate + pl.when epilogue path.
    y1, y2 = sle_forward(x, params, tk=256)
    jax.block_until_ready((y1, y2))
    assert y1.shape == (B, nDense1) and y2.shape == (B, nDense2)

    # Auto-planned tiles (single K step at this tiny D) must agree.
    y1a, y2a = sle_forward(x, params)
    jax.block_until_ready((y1a, y2a))

    # Pure-JAX references.
    S = jnp.asarray(get_matrixS(nDense2 // 2))
    x_flat = x.reshape(B, D)
    # (a) bf16-path reference (kernel computes fc1 with bf16 operands).
    h_bf = jnp.tanh(
        x_flat.astype(jnp.bfloat16).astype(jnp.float32)
        @ w1.astype(jnp.bfloat16).astype(jnp.float32)
        + b1
    )
    y2_bf = jax.nn.sigmoid((h_bf @ w2 + b2) @ S)
    assert jnp.allclose(y1, h_bf, atol=1e-4), "y1 mismatch (bf16-path ref)"
    assert jnp.allclose(y2, y2_bf, atol=1e-4), "y2 mismatch (bf16-path ref)"
    assert jnp.allclose(y1a, y1, atol=1e-4), "y1 mismatch (auto vs forced tiling)"
    assert jnp.allclose(y2a, y2, atol=1e-4), "y2 mismatch (auto vs forced tiling)"
    # (b) full-f32 module reference (bf16 fc1 streaming => loosened tolerance).
    y1_ref = jnp.tanh(x_flat @ w1 + b1)
    y2_ref = jax.nn.sigmoid((y1_ref @ w2 + b2) @ S)
    assert jnp.allclose(y1, y1_ref, atol=2e-2), "y1 mismatch (f32 ref)"
    assert jnp.allclose(y2, y2_ref, atol=2e-2), "y2 mismatch (f32 ref)"

    print("KERNEL_OK")
</pallas_src>

<mosaic_0001>
module attributes {stable_mosaic.version = 11 : i64} {
  func.func @sle_kernel(%arg0: i32, %arg1: i32, %arg2: memref<2x256xf32, #tpu.memory_space<vmem>>, %arg3: memref<256x32xbf16, #tpu.memory_space<vmem>>, %arg4: memref<1x32xf32, #tpu.memory_space<vmem>>, %arg5: memref<32x8xf32, #tpu.memory_space<vmem>>, %arg6: memref<1x8xf32, #tpu.memory_space<vmem>>, %arg7: memref<2x32xf32, #tpu.memory_space<vmem>>, %arg8: memref<2x8xf32, #tpu.memory_space<vmem>>, %arg9: memref<2x32xf32, #tpu.memory_space<vmem>>) attributes {dimension_semantics = [#tpu.dimension_semantics<parallel>, #tpu.dimension_semantics<arbitrary>], iteration_bounds = array<i64: 1, 4>, scalar_prefetch = 0 : i64, scratch_operands = 1 : i64, tpu.core_type = #tpu.core_type<tc>, window_params = [{transform_indices = @transform_0, window_bounds = array<i64: 2, 256>}, {transform_indices = @transform_1, window_bounds = array<i64: 256, 32>}, {pipeline_mode = #tpu.pipeline_mode<synchronous>, transform_indices = @transform_2, window_bounds = array<i64: 1, 32>}, {pipeline_mode = #tpu.pipeline_mode<synchronous>, transform_indices = @transform_3, window_bounds = array<i64: 32, 8>}, {pipeline_mode = #tpu.pipeline_mode<synchronous>, transform_indices = @transform_4, window_bounds = array<i64: 1, 8>}, {transform_indices = @transform_5, window_bounds = array<i64: 2, 32>}, {transform_indices = @transform_6, window_bounds = array<i64: 2, 8>}]} {
    %c0_i32 = arith.constant 0 : i32
    %0 = arith.cmpi eq, %arg1, %c0_i32 : i32
    %1 = arith.extui %0 : i1 to i32
    %c0_i32_0 = arith.constant 0 : i32
    %2 = arith.cmpi ne, %1, %c0_i32_0 : i32
    scf.if %2 {
      %cst_9 = arith.constant 0.000000e+00 : f32
      %13 = vector.broadcast %cst_9 : f32 to vector<2x32xf32>
      %c0_10 = arith.constant 0 : index
      %c0_11 = arith.constant 0 : index
      %14 = vector.load %arg9[%c0_10, %c0_11] : memref<2x32xf32, #tpu.memory_space<vmem>>, vector<2x32xf32>
      tpu.vector_store %arg9[%c0_10, %c0_11], %13 {strides = array<i32>} : memref<2x32xf32, #tpu.memory_space<vmem>>, vector<2x32xf32>,
    } else {
    }
    %c0 = arith.constant 0 : index
    %c0_1 = arith.constant 0 : index
    %3 = vector.load %arg2[%c0, %c0_1] : memref<2x256xf32, #tpu.memory_space<vmem>>, vector<2x256xf32>
    %4 = arith.truncf %3 : vector<2x256xf32> to vector<2x256xbf16>
    %c0_2 = arith.constant 0 : index
    %c0_3 = arith.constant 0 : index
    %5 = vector.load %arg9[%c0_2, %c0_3] : memref<2x32xf32, #tpu.memory_space<vmem>>, vector<2x32xf32>
    %c0_4 = arith.constant 0 : index
    %c0_5 = arith.constant 0 : index
    %6 = vector.load %arg3[%c0_4, %c0_5] : memref<256x32xbf16, #tpu.memory_space<vmem>>, vector<256x32xbf16>
    %cst = arith.constant dense<0.000000e+00> : vector<2x32xf32>
    %7 = tpu.matmul %4, %6, %cst {dimension_numbers = #tpu.dot_dimension_numbers<[1], [0], [0], [1], [0, 0, 1, 1], [], []>} : vector<2x256xbf16>, vector<256x32xbf16>, vector<2x32xf32> -> vector<2x32xf32>
    %8 = arith.addf %5, %7 : vector<2x32xf32>
    %c0_6 = arith.constant 0 : index
    %c0_7 = arith.constant 0 : index
    %9 = vector.load %arg9[%c0_6, %c0_7] : memref<2x32xf32, #tpu.memory_space<vmem>>, vector<2x32xf32>
    tpu.vector_store %arg9[%c0_6, %c0_7], %8 {strides = array<i32>} : memref<2x32xf32, #tpu.memory_space<vmem>>, vector<2x32xf32>,
    %c3_i32 = arith.constant 3 : i32
    %10 = arith.cmpi eq, %arg1, %c3_i32 : i32
    %11 = arith.extui %10 : i1 to i32
    %c0_i32_8 = arith.constant 0 : i32
    %12 = arith.cmpi ne, %11, %c0_i32_8 : i32
    scf.if %12 {
      %c0_9 = arith.constant 0 : index
      %c0_10 = arith.constant 0 : index
      %13 = vector.load %arg9[%c0_9, %c0_10] : memref<2x32xf32, #tpu.memory_space<vmem>>, vector<2x32xf32>
      %c0_11 = arith.constant 0 : index
      %c0_12 = arith.constant 0 : index
      %14 = vector.load %arg4[%c0_11, %c0_12] : memref<1x32xf32, #tpu.memory_space<vmem>>, vector<1x32xf32>
      %15 = vector.broadcast %14 : vector<1x32xf32> to vector<2x32xf32>
      %16 = arith.addf %13, %15 : vector<2x32xf32>
      %17 = math.tanh %16 : vector<2x32xf32>
      %c0_13 = arith.constant 0 : index
      %c0_14 = arith.constant 0 : index
      %18 = vector.load %arg7[%c0_13, %c0_14] : memref<2x32xf32, #tpu.memory_space<vmem>>, vector<2x32xf32>
      tpu.vector_store %arg7[%c0_13, %c0_14], %17 {strides = array<i32>} : memref<2x32xf32, #tpu.memory_space<vmem>>, vector<2x32xf32>,
      %c0_15 = arith.constant 0 : index
      %c0_16 = arith.constant 0 : index
      %19 = vector.load %arg5[%c0_15, %c0_16] : memref<32x8xf32, #tpu.memory_space<vmem>>, vector<32x8xf32>
      %cst_17 = arith.constant dense<0.000000e+00> : vector<2x8xf32>
      %20 = tpu.matmul %17, %19, %cst_17 {dimension_numbers = #tpu.dot_dimension_numbers<[1], [0], [0], [1], [0, 0, 1, 1], [], []>} : vector<2x32xf32>, vector<32x8xf32>, vector<2x8xf32> -> vector<2x8xf32>
      %c0_18 = arith.constant 0 : index
      %c0_19 = arith.constant 0 : index
      %21 = vector.load %arg6[%c0_18, %c0_19] : memref<1x8xf32, #tpu.memory_space<vmem>>, vector<1x8xf32>
      %22 = vector.broadcast %21 : vector<1x8xf32> to vector<2x8xf32>
      %23 = arith.addf %20, %22 : vector<2x8xf32>
      %24 = arith.negf %23 : vector<2x8xf32>
      %25 = math.exp %24 : vector<2x8xf32>
      %cst_20 = arith.constant 1.000000e+00 : f32
      %26 = vector.broadcast %cst_20 : f32 to vector<2x8xf32>
      %27 = arith.addf %26, %25 : vector<2x8xf32>
      %28 = arith.divf %26, %27 : vector<2x8xf32>
      %c0_21 = arith.constant 0 : index
      %c0_22 = arith.constant 0 : index
      %29 = vector.load %arg8[%c0_21, %c0_22] : memref<2x8xf32, #tpu.memory_space<vmem>>, vector<2x8xf32>
      tpu.vector_store %arg8[%c0_21, %c0_22], %28 {strides = array<i32>} : memref<2x8xf32, #tpu.memory_space<vmem>>, vector<2x8xf32>,
    } else {
    }
    return
  }
  func.func @transform_0(%arg0: i32, %arg1: i32) -> (i32, i32) {
    %c0_i32 = arith.constant 0 : i32
    return %arg0, %arg1 : i32, i32
  }
  func.func @transform_1(%arg0: i32, %arg1: i32) -> (i32, i32) {
    %c0_i32 = arith.constant 0 : i32
    %c0_i32_0 = arith.constant 0 : i32
    return %arg1, %c0_i32 : i32, i32
  }
  func.func @transform_2(%arg0: i32, %arg1: i32) -> (i32, i32) {
    %c0_i32 = arith.constant 0 : i32
    %c0_i32_0 = arith.constant 0 : i32
    %c0_i32_1 = arith.constant 0 : i32
    return %c0_i32, %c0_i32_0 : i32, i32
  }
  func.func @transform_3(%arg0: i32, %arg1: i32) -> (i32, i32) {
    %c0_i32 = arith.constant 0 : i32
    %c0_i32_0 = arith.constant 0 : i32
    %c0_i32_1 = arith.constant 0 : i32
    return %c0_i32, %c0_i32_0 : i32, i32
  }
  func.func @transform_4(%arg0: i32, %arg1: i32) -> (i32, i32) {
    %c0_i32 = arith.constant 0 : i32
    %c0_i32_0 = arith.constant 0 : i32
    %c0_i32_1 = arith.constant 0 : i32
    return %c0_i32, %c0_i32_0 : i32, i32
  }
  func.func @transform_5(%arg0: i32, %arg1: i32) -> (i32, i32) {
    %c0_i32 = arith.constant 0 : i32
    %c0_i32_0 = arith.constant 0 : i32
    return %arg0, %c0_i32 : i32, i32
  }
  func.func @transform_6(%arg0: i32, %arg1: i32) -> (i32, i32) {
    %c0_i32 = arith.constant 0 : i32
    %c0_i32_0 = arith.constant 0 : i32
    return %arg0, %c0_i32 : i32, i32
  }
}

</mosaic_0001>

<llo_original>
// kernel: tpu_custom_call.1
$region0: #{tpu_custom_call.1}
  #allocation0 [shape = 'u32[]', space=smem, size = 0x4, offset = 0x4, fixed_abs, tag = 'smem constant byte address 0x4 - core index']
  #allocation1 [shape = 'u32[144,128]{1,0:T(1,128)}', space=vmem, size = 0x12000, scoped, tag = 'internal scratch']
  #allocation2 [shape = 'f32[2,32]{1,0:T(2,128)}', space=vmem, size = 0x400, scoped, tag = 'scratch operand']
  %s0 = inlined_call_operand.vmem [shape: f32[2,1024], index: 0, kind: input, shape index: {}]
  %s1 = inlined_call_operand.vmem [shape: bf16[1024,32], index: 1, kind: input, shape index: {}]
  %s2 = inlined_call_operand.vmem [shape: f32[1,32], index: 2, kind: input, shape index: {}]
  %s3 = inlined_call_operand.vmem [shape: f32[32,8], index: 3, kind: input, shape index: {}]
  %s4 = inlined_call_operand.vmem [shape: f32[1,8], index: 4, kind: input, shape index: {}]
  %s5 = inlined_call_operand.hbm [shape: f32[2,32], index: 5, kind: output, shape index: {0}]
  %s6 = inlined_call_operand.hbm [shape: f32[2,8], index: 6, kind: output, shape index: {1}]
  %7 = xla_tuple %s5, %s6
  %s8 = sld [smem:[#allocation0]]
  $region69: #{tpu_custom_call.1} parent=0
    _
  %s10 = ssub.s32 1, %s8
  %s11 = scalar_select 0, %s10, %s8
  $region1: #{tpu_custom_call.1} parent=0
    #allocation3 [shape = 'u8[1024]{0}', space=vmem, size = 0x400, scoped, tag = 'output window, operand 0, single buffered']
    #allocation4 [shape = 's32[2]{0}', space=sflag, size = 0x8, scoped, tag = 'scoped memory for tpu_custom_call.1']
    #allocation5 [shape = 'u8[1024]{0}', space=vmem, size = 0x400, scoped, tag = 'output window, operand 1, single buffered']
    #allocation6 [shape = 's32[1]{0}', space=sflag, size = 0x4, scoped, tag = 'scoped memory for tpu_custom_call.1']
    %12 = vsyncpa [#allocation4], 0
    %13 = vsyncpa [#allocation6], 0
    loop: start=0, step=1, limit=6
    $region2: #{tpu_custom_call.1} parent=1 // loop_pre_header
      _
    $region3: #{tpu_custom_call.1} parent=1 // loop_header
      %s15 = sphi 0, %s19
      %p16 = scmp.ge.s32.totalorder %s15, 6
      %s22 = sphi 0, %s34
      %s23 = sphi 0, %s30
      %s24 = sphi 0, %s22
      %s25 = sphi 0, %s23
      %s26 = sphi 0, %s24
      %s27 = sphi 0, %s25
      %s39 = sphi 0, %s41
      %s42 = sphi 0, %s39
      %s43 = sphi 0, %s42
      %s59 = sphi 0, %s43
      %s65 = sphi 0, %s67
      %s68 = sphi 0, %s65
      %s69 = sphi 0, %s68
      %s85 = sphi 0, %s69
      %s89 = sphi 0, %s89
      %s91 = sphi 0, %s89
      %s92 = sphi 0, %s91
      %s106 = sphi 0, %s92
      %s110 = sphi 0, %s110
      %s112 = sphi 0, %s110
      %s113 = sphi 0, %s112
      %s127 = sphi 0, %s113
      %s131 = sphi 0, %s131
      %s133 = sphi 0, %s131
      %s134 = sphi 0, %s133
      %s148 = sphi 0, %s134
      %s154 = sphi 0, %s156
      %s157 = sphi 0, %s154
      %s158 = sphi 0, %s157
      %s174 = sphi 0, %s158
      %s180 = sphi 0, %s182
      %s183 = sphi 0, %s180
      %s184 = sphi 0, %s183
      %s200 = sphi 0, %s184
    $region4: #{tpu_custom_call.1} parent=1 // loop_header_branch
      %18 = sbr.rel (%p16) target = $region8
    $region5: #{tpu_custom_call.1} parent=1 // loop_body
      %s20 = ssub.s32 %s15, 1
      %s21 = ssub.s32 %s15, 2
      %s28 = sadd.s32 1, %s23
      %p29 = scmp.ge.s32.totalorder %s28, 4
      %s30 = scalar_select %p29, 0, %s28
      %s31 = sadd.s32 1, %s22
      %s32 = scalar_select %p29, %s31, %s22
      %p33 = scmp.ge.s32.totalorder %s32, 1
      %s34 = scalar_select %p33, 0, %s32
      %s35 = ssub.s32 %s22, %s34
      %s36 = ssub.s32 %s23, %s30
      %s37 = sor.u32 %s35, %s36
      %p38 = scmp.eq.s32.totalorder %s37, 0
      %s40 = sadd.s32 %s39, 1
      %s41 = scalar_select %p38, %s39, %s40
      %p44 = pneg %p38
      %p45 = scmp.eq.s32.totalorder %s15, 3
      %p46 = por %p44, %p45
      %p47 = scmp.ne.s32.totalorder %s39, %s42
      %p48 = scmp.eq.s32.totalorder %s15, 0
      %p49 = por %p47, %p48
      %p50 = scmp.ne.s32.totalorder %s39, %s42
      %p51 = scmp.eq.s32.totalorder %s20, 3
      %p52 = por %p50, %p51
      %p53 = scmp.ne.s32.totalorder %s42, %s43
      %p54 = scmp.eq.s32.totalorder %s20, 0
      %p55 = por %p53, %p54
      %p56 = scmp.ne.s32.totalorder %s42, %s43
      %p57 = scmp.eq.s32.totalorder %s21, 3
      %p58 = por %p56, %p57
      %p60 = scmp.ne.s32.totalorder %s43, %s59
      %p61 = scmp.eq.s32.totalorder %s21, 0
      %p62 = por %p60, %p61
      %s63 = ssub.s32 %s23, %s30
      %p64 = scmp.eq.s32.totalorder %s63, 0
      %s66 = sadd.s32 %s65, 1
      %s67 = scalar_select %p64, %s65, %s66
      %p70 = pneg %p64
      %p71 = scmp.eq.s32.totalorder %s15, 3
      %p72 = por %p70, %p71
      %p73 = scmp.ne.s32.totalorder %s65, %s68
      %p74 = scmp.eq.s32.totalorder %s15, 0
      %p75 = por %p73, %p74
      %p76 = scmp.ne.s32.totalorder %s65, %s68
      %p77 = scmp.eq.s32.totalorder %s20, 3
      %p78 = por %p76, %p77
      %p79 = scmp.ne.s32.totalorder %s68, %s69
      %p80 = scmp.eq.s32.totalorder %s20, 0
      %p81 = por %p79, %p80
      %p82 = scmp.ne.s32.totalorder %s68, %s69
      %p83 = scmp.eq.s32.totalorder %s21, 3
      %p84 = por %p82, %p83
      %p86 = scmp.ne.s32.totalorder %s69, %s85
      %p87 = scmp.eq.s32.totalorder %s21, 0
      %p88 = por %p86, %p87
      %s90 = sadd.s32 %s89, 1
      %p93 = scmp.eq.s32.totalorder %s15, 3
      %p94 = scmp.ne.s32.totalorder %s89, %s91
      %p95 = scmp.eq.s32.totalorder %s15, 0
      %p96 = por %p94, %p95
      %p97 = scmp.ne.s32.totalorder %s89, %s91
      %p98 = scmp.eq.s32.totalorder %s20, 3
      %p99 = por %p97, %p98
      %p100 = scmp.ne.s32.totalorder %s91, %s92
      %p101 = scmp.eq.s32.totalorder %s20, 0
      %p102 = por %p100, %p101
      %p103 = scmp.ne.s32.totalorder %s91, %s92
      %p104 = scmp.eq.s32.totalorder %s21, 3
      %p105 = por %p103, %p104
      %p107 = scmp.ne.s32.totalorder %s92, %s106
      %p108 = scmp.eq.s32.totalorder %s21, 0
      %p109 = por %p107, %p108
      %s111 = sadd.s32 %s110, 1
      %p114 = scmp.eq.s32.totalorder %s15, 3
      %p115 = scmp.ne.s32.totalorder %s110, %s112
      %p116 = scmp.eq.s32.totalorder %s15, 0
      %p117 = por %p115, %p116
      %p118 = scmp.ne.s32.totalorder %s110, %s112
      %p119 = scmp.eq.s32.totalorder %s20, 3
      %p120 = por %p118, %p119
      %p121 = scmp.ne.s32.totalorder %s112, %s113
      %p122 = scmp.eq.s32.totalorder %s20, 0
      %p123 = por %p121, %p122
      %p124 = scmp.ne.s32.totalorder %s112, %s113
      %p125 = scmp.eq.s32.totalorder %s21, 3
      %p126 = por %p124, %p125
      %p128 = scmp.ne.s32.totalorder %s113, %s127
      %p129 = scmp.eq.s32.totalorder %s21, 0
      %p130 = por %p128, %p129
      %s132 = sadd.s32 %s131, 1
      %p135 = scmp.eq.s32.totalorder %s15, 3
      %p136 = scmp.ne.s32.totalorder %s131, %s133
      %p137 = scmp.eq.s32.totalorder %s15, 0
      %p138 = por %p136, %p137
      %p139 = scmp.ne.s32.totalorder %s131, %s133
      %p140 = scmp.eq.s32.totalorder %s20, 3
      %p141 = por %p139, %p140
      %p142 = scmp.ne.s32.totalorder %s133, %s134
      %p143 = scmp.eq.s32.totalorder %s20, 0
      %p144 = por %p142, %p143
      %p145 = scmp.ne.s32.totalorder %s133, %s134
      %p146 = scmp.eq.s32.totalorder %s21, 3
      %p147 = por %p145, %p146
      %p149 = scmp.ne.s32.totalorder %s134, %s148
      %p150 = scmp.eq.s32.totalorder %s21, 0
      %p151 = por %p149, %p150
      %s152 = ssub.s32 %s22, %s34
      %p153 = scmp.eq.s32.totalorder %s152, 0
      %s155 = sadd.s32 %s154, 1
      %s156 = scalar_select %p153, %s154, %s155
      %p159 = pneg %p153
      %p160 = scmp.eq.s32.totalorder %s15, 3
      %p161 = por %p159, %p160
      %p162 = scmp.ne.s32.totalorder %s154, %s157
      %p163 = scmp.eq.s32.totalorder %s15, 0
      %p164 = por %p162, %p163
      %p165 = scmp.ne.s32.totalorder %s154, %s157
      %p166 = scmp.eq.s32.totalorder %s20, 3
      %p167 = por %p165, %p166
      %p168 = scmp.ne.s32.totalorder %s157, %s158
      %p169 = scmp.eq.s32.totalorder %s20, 0
      %p170 = por %p168, %p169
      %p171 = scmp.ne.s32.totalorder %s157, %s158
      %p172 = scmp.eq.s32.totalorder %s21, 3
      %p173 = por %p171, %p172
      %p175 = scmp.ne.s32.totalorder %s158, %s174
      %p176 = scmp.eq.s32.totalorder %s21, 0
      %p177 = por %p175, %p176
      %s178 = ssub.s32 %s22, %s34
      %p179 = scmp.eq.s32.totalorder %s178, 0
      %s181 = sadd.s32 %s180, 1
      %s182 = scalar_select %p179, %s180, %s181
      %p185 = pneg %p179
      %p186 = scmp.eq.s32.totalorder %s15, 3
      %p187 = por %p185, %p186
      %p188 = scmp.ne.s32.totalorder %s180, %s183
      %p189 = scmp.eq.s32.totalorder %s15, 0
      %p190 = por %p188, %p189
      %p191 = scmp.ne.s32.totalorder %s180, %s183
      %p192 = scmp.eq.s32.totalorder %s20, 3
      %p193 = por %p191, %p192
      %p194 = scmp.ne.s32.totalorder %s183, %s184
      %p195 = scmp.eq.s32.totalorder %s20, 0
      %p196 = por %p194, %p195
      %p197 = scmp.ne.s32.totalorder %s183, %s184
      %p198 = scmp.eq.s32.totalorder %s21, 3
      %p199 = por %p197, %p198
      %p201 = scmp.ne.s32.totalorder %s184, %s200
      %p202 = scmp.eq.s32.totalorder %s21, 0
      %p203 = por %p201, %p202
      %p204 = scmp.le.s32.totalorder 1, %s15
      %p205 = scmp.lt.s32.totalorder %s15, 5
      %p206 = pnand %p204, %p205
      %p207 = pneg %p206
      // Predicated region
      $region9: #{tpu_custom_call.1} parent=5 // pred_check
        _
      $region10: #{tpu_custom_call.1} parent=5 // pred_check_branch
        %209 = sbr.rel (%p206) target = $region12
      $region11: #{tpu_custom_call.1} parent=5 // pred_region
        %s210 = ssub.s32 %s15, 1
        // Predicated region
        $region13: #{tpu_custom_call.1} parent=11 // pred_check
          %p211 = pneg %p102
        $region14: #{tpu_custom_call.1} parent=11 // pred_check_branch
          %213 = sbr.rel (%p211) target = $region16
        $region15: #{tpu_custom_call.1} parent=11 // pred_region
          _
        $region16: #{tpu_custom_call.1} parent=11 // pred_fallthru
          _
        // Predicated region
        $region17: #{tpu_custom_call.1} parent=11 // pred_check
          %p214 = pneg %p123
        $region18: #{tpu_custom_call.1} parent=11 // pred_check_branch
          %216 = sbr.rel (%p214) target = $region20
        $region19: #{tpu_custom_call.1} parent=11 // pred_region
          _
        $region20: #{tpu_custom_call.1} parent=11 // pred_fallthru
          _
        // Predicated region
        $region21: #{tpu_custom_call.1} parent=11 // pred_check
          %p217 = pneg %p144
        $region22: #{tpu_custom_call.1} parent=11 // pred_check_branch
          %219 = sbr.rel (%p217) target = $region24
        $region23: #{tpu_custom_call.1} parent=11 // pred_region
          _
        $region24: #{tpu_custom_call.1} parent=11 // pred_fallthru
          _
      $region12: #{tpu_custom_call.1} parent=5 // pred_fallthru
        _
      %p220 = scmp.lt.s32.totalorder %s15, 4
      // Predicated region
      $region25: #{tpu_custom_call.1} parent=5 // pred_check
        %p221 = pneg %p220
      $region26: #{tpu_custom_call.1} parent=5 // pred_check_branch
        %223 = sbr.rel (%p221) target = $region28
      $region27: #{tpu_custom_call.1} parent=5 // pred_region
        // Predicated region
        $region29: #{tpu_custom_call.1} parent=27 // pred_check
          %p224 = pneg %p49
        $region30: #{tpu_custom_call.1} parent=27 // pred_check_branch
          %226 = sbr.rel (%p224) target = $region32
        $region31: #{tpu_custom_call.1} parent=27 // pred_region
          %s227 = smul.u32 2, %s23
          %p228 = scmp.lt.s32.totalorder %s22, 0
          %s229 = scalar_select %p228, %s22, 0
          %p230 = scmp.lt.s32.totalorder %s227, 7
          %s231 = scalar_select %p230, %s227, 7
          %s232 = smul.addr %s229, 8
          %s233 = sadd.s32 %s231, %s232
          %s234 = smul.addr %s233, 2
          %s235 = scalar_lea.vmem %s0, %s234
          %s236 = smul.u32 2, %s23
        $region32: #{tpu_custom_call.1} parent=27 // pred_fallthru
          _
        // Predicated region
        $region33: #{tpu_custom_call.1} parent=27 // pred_check
          %p237 = pneg %p75
        $region34: #{tpu_custom_call.1} parent=27 // pred_check_branch
          %239 = sbr.rel (%p237) target = $region36
        $region35: #{tpu_custom_call.1} parent=27 // pred_region
          %s240 = smul.u32 32, %s23
          %p241 = scmp.lt.s32.totalorder %s240, 127
          %s242 = scalar_select %p241, %s240, 127
          %s243 = smul.addr %s242, 4
          %s244 = scalar_lea.vmem %s1, %s243
          %s245 = smul.u32 32, %s23
        $region36: #{tpu_custom_call.1} parent=27 // pred_fallthru
          _
      $region28: #{tpu_custom_call.1} parent=5 // pred_fallthru
        _
      %p246 = scmp.le.s32.totalorder 1, %s15
      %p247 = scmp.lt.s32.totalorder %s15, 5
      %p248 = pnand %p246, %p247
      %p249 = pneg %p248
      // Predicated region
      $region37: #{tpu_custom_call.1} parent=5 // pred_check
        _
      $region38: #{tpu_custom_call.1} parent=5 // pred_check_branch
        %251 = sbr.rel (%p248) target = $region40
      $region39: #{tpu_custom_call.1} parent=5 // pred_region
        %s252 = ssub.s32 %s15, 1
        %s253 = smul.u32 2, %s25
        %p254 = scmp.lt.s32.totalorder %s24, 0
        %s255 = scalar_select %p254, %s24, 0
        %p256 = scmp.lt.s32.totalorder %s253, 7
        %s257 = scalar_select %p256, %s253, 7
        %s258 = smul.addr %s255, 8
        %s259 = sadd.s32 %s257, %s258
        %s260 = smul.addr %s259, 2
        %s261 = scalar_lea.vmem %s0, %s260
        %p262 = pneg %p55
        %p263 = pneg %p52
        %s264 = smul.u32 32, %s25
        %p265 = scmp.lt.s32.totalorder %s264, 127
        %s266 = scalar_select %p265, %s264, 127
        %s267 = smul.addr %s266, 4
        %s268 = scalar_lea.vmem %s1, %s267
        %p269 = pneg %p81
        %p270 = pneg %p78
        %p271 = pneg %p102
        %p272 = pneg %p99
        %p273 = pneg %p123
        %p274 = pneg %p120
        %p275 = pneg %p144
        %p276 = pneg %p141
        %p277 = pneg %p170
        %p278 = pneg %p167
        %p279 = pneg %p196
        %p280 = pneg %p193
        %s281 = smul.u32 2, %s25
        %p282 = scmp.lt.s32.totalorder %s24, 0
        %s283 = scalar_select %p282, %s24, 0
        %p284 = scmp.lt.s32.totalorder %s281, 7
        %s285 = scalar_select %p284, %s281, 7
        %s286 = smul.addr %s283, 8
        %s287 = sadd.s32 %s285, %s286
        %s288 = smul.addr %s287, 2
        %s289 = scalar_lea.vmem %s0, %s288
        %s290 = smul.u32 2, %s25
        %s291 = smul.u32 32, %s25
        %p292 = scmp.lt.s32.totalorder %s291, 127
        %s293 = scalar_select %p292, %s291, 127
        %s294 = smul.addr %s293, 4
        %s295 = scalar_lea.vmem %s1, %s294
        %s296 = smul.u32 32, %s25
        %p298 = scmp.eq.s32.totalorder %s25, 0
        // Predicated region
        $region41: #{tpu_custom_call.1} parent=39 // pred_check
          %p299 = pneg %p298
        $region42: #{tpu_custom_call.1} parent=39 // pred_check_branch
          %301 = sbr.rel (%p299) target = $region44
        $region43: #{tpu_custom_call.1} parent=39 // pred_region
          %vm302 = vcmask 254976
          %303 = vst.msk [vmem:[#allocation2] sm:$0x3] %vm302, 0.0
        $region44: #{tpu_custom_call.1} parent=39 // pred_fallthru
          _
        %v304 = vld [vmem:[%s289] sm:$0xf]
        %v307 = vunpack.c.l.s4 1983009808
        %v308 = vunpack.c.0.s8 %v307
        %v309 = vlaneseq
        %v310 = vshrl.u32 %v309, 7
        %v311 = vsub.s32 %v308, %v310
        %v312 = vrot.slane %v304, %v311
        %v313 = vcombine.high %v312, %v312
        %v316 = vpack.c.bf16 %v312, %v312
        %v317 = vpack.c.bf16 %v313, %v313
        %v318 = vld [vmem:[#allocation2] sm:$0x3]
        %v319 = vld [vmem:[%s295] sm:$0xf]
        %v320 = vld [vmem:[%s295 + $0x4] sm:$0xf]
        %v321 = vld [vmem:[%s295 + $0x8] sm:$0xf]
        %v322 = vld [vmem:[%s295 + $0xc] sm:$0xf]
        %v323 = vld [vmem:[%s295 + $0x10] sm:$0xf]
        %v324 = vld [vmem:[%s295 + $0x14] sm:$0xf]
        %v325 = vld [vmem:[%s295 + $0x18] sm:$0xf]
        %v326 = vld [vmem:[%s295 + $0x1c] sm:$0xf]
        %v327 = vld [vmem:[%s295 + $0x20] sm:$0xf]
        %v328 = vld [vmem:[%s295 + $0x24] sm:$0xf]
        %v329 = vld [vmem:[%s295 + $0x28] sm:$0xf]
        %v330 = vld [vmem:[%s295 + $0x2c] sm:$0xf]
        %v331 = vld [vmem:[%s295 + $0x30] sm:$0xf]
        %v332 = vld [vmem:[%s295 + $0x34] sm:$0xf]
        %v333 = vld [vmem:[%s295 + $0x38] sm:$0xf]
        %v334 = vld [vmem:[%s295 + $0x3c] sm:$0xf]
        %v335 = vld [vmem:[%s295 + $0x40] sm:$0xf]
        %v336 = vld [vmem:[%s295 + $0x44] sm:$0xf]
        %v337 = vld [vmem:[%s295 + $0x48] sm:$0xf]
        %v338 = vld [vmem:[%s295 + $0x4c] sm:$0xf]
        %v339 = vld [vmem:[%s295 + $0x50] sm:$0xf]
        %v340 = vld [vmem:[%s295 + $0x54] sm:$0xf]
        %v341 = vld [vmem:[%s295 + $0x58] sm:$0xf]
        %v342 = vld [vmem:[%s295 + $0x5c] sm:$0xf]
        %v343 = vld [vmem:[%s295 + $0x60] sm:$0xf]
        %v344 = vld [vmem:[%s295 + $0x64] sm:$0xf]
        %v345 = vld [vmem:[%s295 + $0x68] sm:$0xf]
        %v346 = vld [vmem:[%s295 + $0x6c] sm:$0xf]
        %v347 = vld [vmem:[%s295 + $0x70] sm:$0xf]
        %v348 = vld [vmem:[%s295 + $0x74] sm:$0xf]
        %v349 = vld [vmem:[%s295 + $0x78] sm:$0xf]
        %v350 = vld [vmem:[%s295 + $0x7c] sm:$0xf]
        %v383 = vunpack.c.l.b16 %v319
        %v384 = vunpack.c.l.b16 %v320
        %v385 = vunpack.c.l.b16 %v321
        %v386 = vunpack.c.l.b16 %v322
        %v387 = vunpack.c.l.b16 %v323
        %v388 = vunpack.c.l.b16 %v324
        %v389 = vunpack.c.l.b16 %v325
        %v390 = vunpack.c.l.b16 %v326
        %v391 = vunpack.c.l.b16 %v327
        %v392 = vunpack.c.l.b16 %v328
        %v393 = vunpack.c.l.b16 %v329
        %v394 = vunpack.c.l.b16 %v330
        %v395 = vunpack.c.l.b16 %v331
        %v396 = vunpack.c.l.b16 %v332
        %v397 = vunpack.c.l.b16 %v333
        %v398 = vunpack.c.l.b16 %v334
        %v399 = vunpack.c.l.b16 %v335
        %v400 = vunpack.c.l.b16 %v336
        %v401 = vunpack.c.l.b16 %v337
        %v402 = vunpack.c.l.b16 %v338
        %v403 = vunpack.c.l.b16 %v339
        %v404 = vunpack.c.l.b16 %v340
        %v405 = vunpack.c.l.b16 %v341
        %v406 = vunpack.c.l.b16 %v342
        %v407 = vunpack.c.l.b16 %v343
        %v408 = vunpack.c.l.b16 %v344
        %v409 = vunpack.c.l.b16 %v345
        %v410 = vunpack.c.l.b16 %v346
        %v411 = vunpack.c.l.b16 %v347
        %v412 = vunpack.c.l.b16 %v348
        %v413 = vunpack.c.l.b16 %v349
        %v414 = vunpack.c.l.b16 %v350
        %v415 = vpack.c.b16 %v384, %v383
        %v416 = vpack.c.b16 %v386, %v385
        %v417 = vpack.c.b16 %v388, %v387
        %v418 = vpack.c.b16 %v390, %v389
        %v419 = vpack.c.b16 %v392, %v391
        %v420 = vpack.c.b16 %v394, %v393
        %v421 = vpack.c.b16 %v396, %v395
        %v422 = vpack.c.b16 %v398, %v397
        %v423 = vpack.c.b16 %v400, %v399
        %v424 = vpack.c.b16 %v402, %v401
        %v425 = vpack.c.b16 %v404, %v403
        %v426 = vpack.c.b16 %v406, %v405
        %v427 = vpack.c.b16 %v408, %v407
        %v428 = vpack.c.b16 %v410, %v409
        %v429 = vpack.c.b16 %v412, %v411
        %v430 = vpack.c.b16 %v414, %v413
        %447 = vmatprep.subr.bf16.mxu0 0
        %448 = vmatpush1.bf16.msra.mxu0 %v415
        %449 = vmatprep.subr.bf16.mxu0 0
        %450 = vmatpush1.bf16.msra.mxu0 %v416
        %451 = vmatprep.subr.bf16.mxu0 0
        %452 = vmatpush1.bf16.msra.mxu0 %v417
        %453 = vmatprep.subr.bf16.mxu0 0
        %454 = vmatpush1.bf16.msra.mxu0 %v418
        %455 = vmatprep.subr.bf16.mxu0 0
        %456 = vmatpush1.bf16.msra.mxu0 %v419
        %457 = vmatprep.subr.bf16.mxu0 0
        %458 = vmatpush1.bf16.msra.mxu0 %v420
        %459 = vmatprep.subr.bf16.mxu0 0
        %460 = vmatpush1.bf16.msra.mxu0 %v421
        %461 = vmatprep.subr.bf16.mxu0 0
        %462 = vmatpush1.bf16.msra.mxu0 %v422
        %463 = vmatprep.subr.bf16.mxu0 0
        %464 = vmatpush1.bf16.msra.mxu0 %v423
        %465 = vmatprep.subr.bf16.mxu0 0
        %466 = vmatpush1.bf16.msra.mxu0 %v424
        %467 = vmatprep.subr.bf16.mxu0 0
        %468 = vmatpush1.bf16.msra.mxu0 %v425
        %469 = vmatprep.subr.bf16.mxu0 0
        %470 = vmatpush1.bf16.msra.mxu0 %v426
        %471 = vmatprep.subr.bf16.mxu0 0
        %472 = vmatpush1.bf16.msra.mxu0 %v427
        %473 = vmatprep.subr.bf16.mxu0 0
        %474 = vmatpush1.bf16.msra.mxu0 %v428
        %475 = vmatprep.subr.bf16.mxu0 0
        %476 = vmatpush1.bf16.msra.mxu0 %v429
        %477 = vmatprep.subr.bf16.mxu0 0
        %478 = vmatpush1.bf16.msra.mxu0 %v430
        %479 = vmatprep.mubr.bf16.mxu0 %v317
        %480 = vmatmul.mubr.bf16.gmra.mrb[0].mxu0 %v316
        %v481 = vpop.f32.mrb[0].mxu0
        %v482 = vadd.f32 0.0, %v481
        %v483 = vpop.f32.mrb[0].mxu0
        %v484 = vpop.f32.mrb[0].mxu0
        %v485 = vpop.f32.mrb[0].mxu0
        %486 = vdwg.mxu0
        %v487 = vadd.f32 %v318, %v482
        %vm488 = vcmask 254976
        %489 = vst.msk [vmem:[#allocation2] sm:$0x3] %vm488, %v487
        %p490 = scmp.eq.s32.totalorder %s25, 3
        // Predicated region
        $region45: #{tpu_custom_call.1} parent=39 // pred_check
          %p491 = pneg %p490
        $region46: #{tpu_custom_call.1} parent=39 // pred_check_branch
          %493 = sbr.rel (%p491) target = $region48
        $region47: #{tpu_custom_call.1} parent=39 // pred_region
          %v494 = vld [vmem:[#allocation2] sm:$0x3]
          %v495 = vld [vmem:[%s2] sm:$0x1]
          %v497 = vlaneseq
          %v498 = vshrl.u32 %v497, 7
          %v499 = vsub.s32 0, %v498
          %v500 = vrot.slane %v495, %v499
          %v502 = vadd.f32 %v494, %v500
          %v503 = vtanh.pop %v502
          %504 = vst.msk [vmem:[#allocation3] sm:$0x3] %vm488, %v503
          %v505 = vld [vmem:[%s3] sm:$0xff]
          %v506 = vld [vmem:[%s3 + $0x8] sm:$0xff]
          %v507 = vld [vmem:[%s3 + $0x10] sm:$0xff]
          %v508 = vld [vmem:[%s3 + $0x18] sm:$0xff]
          %v509 = vld [vmem:[%s4] sm:$0x1]
          %v511 = vlaneseq
          %v512 = vshrl.u32 %v511, 7
          %v513 = vsub.s32 0, %v512
          %v514 = vrot.slane %v509, %v513
          %vm516 = vcmask 261120
          %v518 = vsel %vm516, %v503, 0
          %520 = vmatprep.subr.mxu0 0.0
          %521 = vmatpush1.msra.mxu0 %v505
          %522 = vmatprep.subr.mxu0 0.0
          %523 = vmatpush1.msra.mxu0 %v506
          %524 = vmatprep.subr.mxu0 0.0
          %525 = vmatpush1.msra.mxu0 %v507
          %526 = vmatprep.subr.mxu0 0.0
          %527 = vmatpush1.msra.mxu0 %v508
          %528 = vmatprep.subr.mxu0 0.0
          %529 = vmatpush1.msra.mxu0 0.0
          %530 = vmatprep.subr.mxu0 0.0
          %531 = vmatpush1.msra.mxu0 0.0
          %532 = vmatprep.subr.mxu0 0.0
          %533 = vmatpush1.msra.mxu0 0.0
          %534 = vmatprep.subr.mxu0 0.0
          %535 = vmatpush1.msra.mxu0 0.0
          %536 = vmatprep.subr.mxu0 0.0
          %537 = vmatpush1.msra.mxu0 0.0
          %538 = vmatprep.subr.mxu0 0.0
          %539 = vmatpush1.msra.mxu0 0.0
          %540 = vmatprep.subr.mxu0 0.0
          %541 = vmatpush1.msra.mxu0 0.0
          %542 = vmatprep.subr.mxu0 0.0
          %543 = vmatpush1.msra.mxu0 0.0
          %544 = vmatprep.subr.mxu0 0.0
          %545 = vmatpush1.msra.mxu0 0.0
          %546 = vmatprep.subr.mxu0 0.0
          %547 = vmatpush1.msra.mxu0 0.0
          %548 = vmatprep.subr.mxu0 0.0
          %549 = vmatpush1.msra.mxu0 0.0
          %550 = vmatprep.subr.mxu0 0.0
          %551 = vmatpush1.msra.mxu0 0.0
          %552 = vmatprep.subr.mxu0 0.0
          %553 = vmatpush1.msra.mxu0 0.0
          %554 = vmatprep.subr.mxu0 0.0
          %555 = vmatpush1.msra.mxu0 0.0
          %556 = vmatprep.subr.mxu0 0.0
          %557 = vmatpush1.msra.mxu0 0.0
          %558 = vmatprep.subr.mxu0 0.0
          %559 = vmatpush1.msra.mxu0 0.0
          %560 = vmatprep.subr.mxu0 0.0
          %561 = vmatpush1.msra.mxu0 0.0
          %562 = vmatprep.subr.mxu0 0.0
          %563 = vmatpush1.msra.mxu0 0.0
          %564 = vmatprep.subr.mxu0 0.0
          %565 = vmatpush1.msra.mxu0 0.0
          %566 = vmatprep.subr.mxu0 0.0
          %567 = vmatpush1.msra.mxu0 0.0
          %568 = vmatprep.subr.mxu0 0.0
          %569 = vmatpush1.msra.mxu0 0.0
          %570 = vmatprep.subr.mxu0 0.0
          %571 = vmatpush1.msra.mxu0 0.0
          %572 = vmatprep.subr.mxu0 0.0
          %573 = vmatpush1.msra.mxu0 0.0
          %574 = vmatprep.subr.mxu0 0.0
          %575 = vmatpush1.msra.mxu0 0.0
          %576 = vmatprep.subr.mxu0 0.0
          %577 = vmatpush1.msra.mxu0 0.0
          %578 = vmatprep.subr.mxu0 0.0
          %579 = vmatpush1.msra.mxu0 0.0
          %580 = vmatprep.subr.mxu0 0.0
          %581 = vmatpush1.msra.mxu0 0.0
          %582 = vmatprep.subr.mxu0 0.0
          %583 = vmatpush1.msra.mxu0 0.0
          %584 = vmatprep.mubr.f32.mxu0 0.0
          %585 = vmatmul.mubr.f32.gmra.mrb[0].mxu0 %v518
          %v586 = vpop.f32.mrb[0].mxu0
          %v587 = vadd.f32 %v514, %v586
          %v588 = vpop.f32.mrb[0].mxu0
          %589 = vdwg.mxu0
          %v590 = vxor.u32 %v587, 2147483648
          %v591 = vmul.f32 %v590, 1.442695
          %v592 = vpow.pop %v591
          %v593 = vadd.f32 %v592, 1.0
          %v594 = vrcp.pop %v593
          %v595 = vmul.f32 1.0, %v594
          %vm596 = vcmask 58368
          %597 = vst.msk [vmem:[#allocation5] sm:$0x3] %vm596, %v595
        $region48: #{tpu_custom_call.1} parent=39 // pred_fallthru
          _
        // Predicated region
        $region49: #{tpu_custom_call.1} parent=39 // pred_check
          %p598 = pneg %p167
        $region50: #{tpu_custom_call.1} parent=39 // pred_check_branch
          %600 = sbr.rel (%p598) target = $region52
        $region51: #{tpu_custom_call.1} parent=39 // pred_region
          %s602 = ssub.s32 32, 32
          %603 = vsyncadd [#allocation4], %s602
          %s604 = smul.addr %s24, 32
          %s605 = scalar_lea.hbm %s5, %s604
          %s607 = sshll.u32 [#allocation3], 4
          %s608 = int_to_ptr.vmem [resolvable:$true] %s607
          %610 = dma.vmem_to_hbm [thread:$0]  %s608, 32, %s605, [#allocation4]
        $region52: #{tpu_custom_call.1} parent=39 // pred_fallthru
          _
        // Predicated region
        $region53: #{tpu_custom_call.1} parent=39 // pred_check
          %p611 = pneg %p193
        $region54: #{tpu_custom_call.1} parent=39 // pred_check_branch
          %613 = sbr.rel (%p611) target = $region56
        $region55: #{tpu_custom_call.1} parent=39 // pred_region
          %s615 = ssub.s32 32, 32
          %616 = vsyncadd [#allocation6], %s615
          %s617 = smul.addr %s24, 32
          %s618 = scalar_lea.hbm %s6, %s617
          %s620 = sshll.u32 [#allocation5], 4
          %s621 = int_to_ptr.vmem [resolvable:$true] %s620
          %623 = dma.vmem_to_hbm [thread:$0]  %s621, 32, %s618, [#allocation6]
        $region56: #{tpu_custom_call.1} parent=39 // pred_fallthru
          _
        // Predicated region
        $region57: #{tpu_custom_call.1} parent=39 // pred_check
          %p624 = pneg %p167
        $region58: #{tpu_custom_call.1} parent=39 // pred_check_branch
          %626 = sbr.rel (%p624) target = $region60
        $region59: #{tpu_custom_call.1} parent=39 // pred_region
          %627 = dma.done [#allocation4], 32
        $region60: #{tpu_custom_call.1} parent=39 // pred_fallthru
          _
        // Predicated region
        $region61: #{tpu_custom_call.1} parent=39 // pred_check
          %p628 = pneg %p193
        $region62: #{tpu_custom_call.1} parent=39 // pred_check_branch
          %630 = sbr.rel (%p628) target = $region64
        $region63: #{tpu_custom_call.1} parent=39 // pred_region
          %631 = dma.done [#allocation6], 32
        $region64: #{tpu_custom_call.1} parent=39 // pred_fallthru
          _
      $region40: #{tpu_custom_call.1} parent=5 // pred_fallthru
        _
      %p632 = scmp.le.s32.totalorder 2, %s15
      // Predicated region
      $region65: #{tpu_custom_call.1} parent=5 // pred_check
        %p633 = pneg %p632
      $region66: #{tpu_custom_call.1} parent=5 // pred_check_branch
        %635 = sbr.rel (%p633) target = $region68
      $region67: #{tpu_custom_call.1} parent=5 // pred_region
        %s636 = ssub.s32 %s15, 2
      $region68: #{tpu_custom_call.1} parent=5 // pred_fallthru
        _
    $region6: #{tpu_custom_call.1} parent=1 // loop_footer
      %s19 = sadd.s32 1, %s15
    $region7: #{tpu_custom_call.1} parent=1 // loop_footer_branch
      %14 = sbr.rel target = $region3
    $region8: #{tpu_custom_call.1} parent=1 // loop_exit
      _
    %637 = vsyncpa [#allocation4], 1
    %s638 = scalar_lea.sflag [#allocation4], 1
    %639 = vsyncpa %s638, 1
    %640 = vsyncpa [#allocation6], 1

</llo_original>
